<compile_context>
chip_gen: v6e
topology: v6e:2x2x1
jax: 0.10.0
libtpu: 0.0.40
codegen_flags: <defaults>
</compile_context>

<pallas_src>
import functools

import jax
import jax.numpy as jnp
from jax.experimental import pallas as pl
from jax.experimental.pallas import tpu as pltpu


def _round_up(n, m):
    return (n + m - 1) // m * m


def _gemm_kernel(p_ref, w_ref, o_ref):
    # One MXU matmul; all operands VMEM-resident.  Output (rows_p, C2p) has
    # sublane- and lane-aligned dims -> unmasked vst.
    o_ref[...] = jnp.dot(p_ref[...], w_ref[...],
                         preferred_element_type=jnp.float32)


def _compose_conv_weights(w1, w2, stride):
    """Compose conv2(conv1(x)) (both VALID, same stride, no bias, no
    nonlinearity in between) into one effective convolution.

      conv1: (C1, Cin, KH, KW)   conv2: (C2, C1, KH2, KW2)
      composed kernel: KH + (KH2-1)*stride, composed stride: stride*stride

    Exact in real arithmetic; only the f32 summation order changes.
    """
    C1, Cin, KH, KW = w1.shape
    C2, C1b, KH2, KW2 = w2.shape
    assert C1 == C1b
    KEh = KH + (KH2 - 1) * stride
    KEw = KW + (KW2 - 1) * stride
    weff = jnp.zeros((C2, Cin, KEh, KEw), jnp.float32)
    for a in range(KH2):
        for b in range(KW2):
            # (C2, C1) x (C1, Cin, KH, KW) -> (C2, Cin, KH, KW)
            contrib = jnp.einsum("dc,cikl->dikl", w2[:, :, a, b], w1)
            weff = weff.at[:, :,
                           stride * a: stride * a + KH,
                           stride * b: stride * b + KW].add(contrib)
    return weff, KEh, KEw


def make_conv2d_model(w1, w2, stride=2):
    """One-time weight prep (hoisted out of the per-call hot path).

    Returns a jitted forward(x) equivalent to Conv2dModel.forward.
    """
    w1 = jnp.asarray(w1, jnp.float32)
    w2 = jnp.asarray(w2, jnp.float32)
    Cin = w1.shape[1]
    C2 = w2.shape[0]

    weff, KEh, KEw = _compose_conv_weights(w1, w2, stride)
    K = KEh * KEw * Cin                      # 7*7*3 = 147
    Kp = _round_up(K, 128)                   # 256: lane-dense patch loads
    C2p = _round_up(C2, 128)                 # 128: lane-dense output store
    # GEMM weight with K-order (u, v, cin), matching the im2col below.
    wmat = jnp.transpose(weff, (2, 3, 1, 0)).reshape(K, C2)
    wmat = jnp.pad(wmat, ((0, Kp - K), (0, C2p - C2)))
    s_eff = stride * stride                  # composed stride = 4

    @jax.jit
    def forward(x, wmat):
        N, Cin_x, H, W = x.shape
        assert Cin_x == Cin
        Ho = (H - KEh) // s_eff + 1
        Wo = (W - KEw) // s_eff + 1
        rows = N * Ho * Wo
        rows_p = _round_up(rows, 8)          # sublane-aligned GEMM rows

        # ---- input-only glue: im2col via static slices (XLA fuses these) ----
        x_nhwc = jnp.transpose(x.astype(jnp.float32), (0, 2, 3, 1))
        cols = []
        for u in range(KEh):
            for v in range(KEw):
                cols.append(
                    x_nhwc[:,
                           u: u + s_eff * (Ho - 1) + 1: s_eff,
                           v: v + s_eff * (Wo - 1) + 1: s_eff,
                           :])
        p = jnp.concatenate(cols, axis=-1).reshape(rows, K)
        p = jnp.pad(p, ((0, rows_p - rows), (0, Kp - K)))

        # ---- hot path: one pallas_call, single grid step, all in VMEM ----
        out = pl.pallas_call(
            _gemm_kernel,
            out_shape=jax.ShapeDtypeStruct((rows_p, C2p), jnp.float32),
            in_specs=[pl.BlockSpec(memory_space=pltpu.MemorySpace.VMEM)] * 2,
            out_specs=pl.BlockSpec(memory_space=pltpu.MemorySpace.VMEM),
        )(p, wmat)

        # drop the row/channel padding, back to NCHW
        out = out[:rows, :C2].reshape(N, Ho, Wo, C2)
        return jnp.transpose(out, (0, 3, 1, 2))

    return functools.partial(forward, wmat=wmat)


def _reference(x, w1, w2):
    dn = ("NCHW", "OIHW", "NCHW")
    y = jax.lax.conv_general_dilated(
        x, w1, window_strides=(2, 2), padding="VALID", dimension_numbers=dn)
    y = jax.lax.conv_general_dilated(
        y, w2, window_strides=(2, 2), padding="VALID", dimension_numbers=dn)
    return y


if __name__ == "__main__":
    # Small, deterministic setup consistent with the module:
    #   conv1: Conv2d(3 -> dim, k=3, s=2, bias=False)
    #   conv2: Conv2d(dim -> dim, k=3, s=2, bias=False)
    dim = 32
    N, Cin, H, W = 2, 3, 16, 16

    key = jax.random.PRNGKey(0)
    kx, k1, k2 = jax.random.split(key, 3)
    x = jax.random.normal(kx, (N, Cin, H, W), jnp.float32)
    w1 = jax.random.normal(k1, (dim, Cin, 3, 3), jnp.float32) * 0.1
    w2 = jax.random.normal(k2, (dim, dim, 3, 3), jnp.float32) * 0.05

    model = make_conv2d_model(w1, w2)      # one-time weight composition / padding
    y = jax.block_until_ready(model(x))    # per-call hot path: glue + 1 pallas_call

    ref = _reference(x, w1, w2)
    assert y.shape == ref.shape == (N, dim, 3, 3), (y.shape, ref.shape)
    max_err = float(jnp.max(jnp.abs(y - ref)))
    assert jnp.allclose(y, ref, atol=1e-4, rtol=1e-4), max_err

    print("KERNEL_OK")
</pallas_src>

<mosaic_0001>
module attributes {stable_mosaic.version = 11 : i64} {
  func.func @_gemm_kernel(%arg0: memref<24x256xf32, #tpu.memory_space<vmem>>, %arg1: memref<256x128xf32, #tpu.memory_space<vmem>>, %arg2: memref<24x128xf32, #tpu.memory_space<vmem>>) attributes {dimension_semantics = [], scalar_prefetch = 0 : i64, scratch_operands = 0 : i64, tpu.core_type = #tpu.core_type<tc>} {
    %c0 = arith.constant 0 : index
    %c0_0 = arith.constant 0 : index
    %0 = vector.load %arg0[%c0, %c0_0] : memref<24x256xf32, #tpu.memory_space<vmem>>, vector<24x256xf32>
    %c0_1 = arith.constant 0 : index
    %c0_2 = arith.constant 0 : index
    %1 = vector.load %arg1[%c0_1, %c0_2] : memref<256x128xf32, #tpu.memory_space<vmem>>, vector<256x128xf32>
    %cst = arith.constant dense<0.000000e+00> : vector<24x128xf32>
    %2 = tpu.matmul %0, %1, %cst {dimension_numbers = #tpu.dot_dimension_numbers<[1], [0], [0], [1], [0, 0, 1, 1], [], []>} : vector<24x256xf32>, vector<256x128xf32>, vector<24x128xf32> -> vector<24x128xf32>
    %c0_3 = arith.constant 0 : index
    %c0_4 = arith.constant 0 : index
    %3 = vector.load %arg2[%c0_3, %c0_4] : memref<24x128xf32, #tpu.memory_space<vmem>>, vector<24x128xf32>
    tpu.vector_store %arg2[%c0_3, %c0_4], %2 {strides = array<i32>} : memref<24x128xf32, #tpu.memory_space<vmem>>, vector<24x128xf32>,
    return
  }
}

</mosaic_0001>

<llo_original>
// kernel: forward.1
$region0: #{forward.1}
  #allocation0 [shape = 'u32[]', space=smem, size = 0x4, offset = 0x4, fixed_abs, tag = 'smem constant byte address 0x4 - core index']
  #allocation1 [shape = 'u32[144,128]{1,0:T(1,128)}', space=vmem, size = 0x12000, scoped, tag = 'internal scratch']
  %s0 = inlined_call_operand.vmem [shape: f32[24,256], index: 0, kind: input, shape index: {}]
  %s1 = inlined_call_operand.vmem [shape: f32[256,128], index: 1, kind: input, shape index: {}]
  %s2 = inlined_call_operand.vmem [shape: f32[24,128], index: 2, kind: output, shape index: {}]
  %s3 = sld [smem:[#allocation0]]
  $region18: #{forward.1} parent=0
    _
  %s5 = ssub.s32 1, %s3
  %s6 = scalar_select 0, %s5, %s3
  // Predicated region
  $region2: #{forward.1} parent=0 // pred_check
    _
  $region3: #{forward.1} parent=0 // pred_check_branch
    %8 = sbr.rel (0) target = $region5
  $region4: #{forward.1} parent=0 // pred_region
    _
  $region5: #{forward.1} parent=0 // pred_fallthru
    _
  // Predicated region
  $region6: #{forward.1} parent=0 // pred_check
    _
  $region7: #{forward.1} parent=0 // pred_check_branch
    %10 = sbr.rel (0) target = $region9
  $region8: #{forward.1} parent=0 // pred_region
    _
  $region9: #{forward.1} parent=0 // pred_fallthru
    _
  %v11 = vld [vmem:[%s0] sm:$0xff]
  %v12 = vld [vmem:[%s0 + $0x8] sm:$0xff]
  %v13 = vld [vmem:[%s0 + $0x10] sm:$0xff]
  %v14 = vld [vmem:[%s0 + $0x18] sm:$0xff]
  %v15 = vld [vmem:[%s0 + $0x20] sm:$0xff]
  %v16 = vld [vmem:[%s0 + $0x28] sm:$0xff]
  %v17 = vld [vmem:[%s1] sm:$0xff]
  %v18 = vld [vmem:[%s1 + $0x8] sm:$0xff]
  %v19 = vld [vmem:[%s1 + $0x10] sm:$0xff]
  %v20 = vld [vmem:[%s1 + $0x18] sm:$0xff]
  %v21 = vld [vmem:[%s1 + $0x20] sm:$0xff]
  %v22 = vld [vmem:[%s1 + $0x28] sm:$0xff]
  %v23 = vld [vmem:[%s1 + $0x30] sm:$0xff]
  %v24 = vld [vmem:[%s1 + $0x38] sm:$0xff]
  %v25 = vld [vmem:[%s1 + $0x40] sm:$0xff]
  %v26 = vld [vmem:[%s1 + $0x48] sm:$0xff]
  %v27 = vld [vmem:[%s1 + $0x50] sm:$0xff]
  %v28 = vld [vmem:[%s1 + $0x58] sm:$0xff]
  %v29 = vld [vmem:[%s1 + $0x60] sm:$0xff]
  %v30 = vld [vmem:[%s1 + $0x68] sm:$0xff]
  %v31 = vld [vmem:[%s1 + $0x70] sm:$0xff]
  %v32 = vld [vmem:[%s1 + $0x78] sm:$0xff]
  %v33 = vld [vmem:[%s1 + $0x80] sm:$0xff]
  %v34 = vld [vmem:[%s1 + $0x88] sm:$0xff]
  %v35 = vld [vmem:[%s1 + $0x90] sm:$0xff]
  %v36 = vld [vmem:[%s1 + $0x98] sm:$0xff]
  %v37 = vld [vmem:[%s1 + $0xa0] sm:$0xff]
  %v38 = vld [vmem:[%s1 + $0xa8] sm:$0xff]
  %v39 = vld [vmem:[%s1 + $0xb0] sm:$0xff]
  %v40 = vld [vmem:[%s1 + $0xb8] sm:$0xff]
  %v41 = vld [vmem:[%s1 + $0xc0] sm:$0xff]
  %v42 = vld [vmem:[%s1 + $0xc8] sm:$0xff]
  %v43 = vld [vmem:[%s1 + $0xd0] sm:$0xff]
  %v44 = vld [vmem:[%s1 + $0xd8] sm:$0xff]
  %v45 = vld [vmem:[%s1 + $0xe0] sm:$0xff]
  %v46 = vld [vmem:[%s1 + $0xe8] sm:$0xff]
  %v47 = vld [vmem:[%s1 + $0xf0] sm:$0xff]
  %v48 = vld [vmem:[%s1 + $0xf8] sm:$0xff]
  %49 = vmatprep.subr.mxu0 0.0
  %50 = vmatpush1.msra.mxu0 %v32
  %51 = vmatprep.subr.mxu0 0.0
  %52 = vmatpush1.msra.mxu0 %v31
  %53 = vmatprep.subr.mxu0 0.0
  %54 = vmatpush1.msra.mxu0 %v30
  %55 = vmatprep.subr.mxu0 0.0
  %56 = vmatpush1.msra.mxu0 %v29
  %57 = vmatprep.subr.mxu0 0.0
  %58 = vmatpush1.msra.mxu0 %v28
  %59 = vmatprep.subr.mxu0 0.0
  %60 = vmatpush1.msra.mxu0 %v27
  %61 = vmatprep.subr.mxu0 0.0
  %62 = vmatpush1.msra.mxu0 %v26
  %63 = vmatprep.subr.mxu0 0.0
  %64 = vmatpush1.msra.mxu0 %v25
  %65 = vmatprep.subr.mxu0 0.0
  %66 = vmatpush1.msra.mxu0 %v24
  %67 = vmatprep.subr.mxu0 0.0
  %68 = vmatpush1.msra.mxu0 %v23
  %69 = vmatprep.subr.mxu0 0.0
  %70 = vmatpush1.msra.mxu0 %v22
  %71 = vmatprep.subr.mxu0 0.0
  %72 = vmatpush1.msra.mxu0 %v21
  %73 = vmatprep.subr.mxu0 0.0
  %74 = vmatpush1.msra.mxu0 %v20
  %75 = vmatprep.subr.mxu0 0.0
  %76 = vmatpush1.msra.mxu0 %v19
  %77 = vmatprep.subr.mxu0 0.0
  %78 = vmatpush1.msra.mxu0 %v18
  %79 = vmatprep.subr.mxu0 0.0
  %80 = vmatpush1.msra.mxu0 %v17
  %81 = vmatprep.subr.mxu0 0.0
  %82 = vmatpush2.msra.mxu0 %v48
  %83 = vmatprep.subr.mxu0 0.0
  %84 = vmatpush2.msra.mxu0 %v47
  %85 = vmatprep.subr.mxu0 0.0
  %86 = vmatpush2.msra.mxu0 %v46
  %87 = vmatprep.subr.mxu0 0.0
  %88 = vmatpush2.msra.mxu0 %v45
  %89 = vmatprep.subr.mxu0 0.0
  %90 = vmatpush2.msra.mxu0 %v44
  %91 = vmatprep.subr.mxu0 0.0
  %92 = vmatpush2.msra.mxu0 %v43
  %93 = vmatprep.subr.mxu0 0.0
  %94 = vmatpush2.msra.mxu0 %v42
  %95 = vmatprep.subr.mxu0 0.0
  %96 = vmatpush2.msra.mxu0 %v41
  %97 = vmatprep.subr.mxu0 0.0
  %98 = vmatpush2.msra.mxu0 %v40
  %99 = vmatprep.subr.mxu0 0.0
  %100 = vmatpush2.msra.mxu0 %v39
  %101 = vmatprep.subr.mxu0 0.0
  %102 = vmatpush2.msra.mxu0 %v38
  %103 = vmatprep.subr.mxu0 0.0
  %104 = vmatpush2.msra.mxu0 %v37
  %105 = vmatprep.subr.mxu0 0.0
  %106 = vmatpush2.msra.mxu0 %v36
  %107 = vmatprep.subr.mxu0 0.0
  %108 = vmatpush2.msra.mxu0 %v35
  %109 = vmatprep.subr.mxu0 0.0
  %110 = vmatpush2.msra.mxu0 %v34
  %111 = vmatprep.subr.mxu0 0.0
  %112 = vmatpush2.msra.mxu0 %v33
  %113 = vmatprep.mubr.f32.mxu0 %v12
  %114 = vmatmul.mubr.f32.gmra.mxu0 %v11
  %v115 = vpop.f32.mrf.mxu0
  %v116 = vadd.f32 0.0, %v115
  %v117 = vpop.f32.mrf.mxu0
  %118 = vmatprep.mubr.f32.mxu0 %v14
  %119 = vmatmul.mubr.f32.gmra.mxu0 %v13
  %v120 = vpop.f32.mrf.mxu0
  %v121 = vadd.f32 0.0, %v120
  %v122 = vpop.f32.mrf.mxu0
  %123 = vmatprep.mubr.f32.mxu0 %v16
  %124 = vmatmul.mubr.f32.gmra.mxu0 %v15
  %v125 = vpop.f32.mrf.mxu0
  %v126 = vadd.f32 0.0, %v125
  %v127 = vpop.f32.mrf.mxu0
  %128 = vdwg.mxu0
  %129 = vst [vmem:[%s2] sm:$0xff] %v116
  %130 = vst [vmem:[%s2 + $0x8] sm:$0xff] %v121
  %131 = vst [vmem:[%s2 + $0x10] sm:$0xff] %v126
  // Predicated region
  $region10: #{forward.1} parent=0 // pred_check
    _
  $region11: #{forward.1} parent=0 // pred_check_branch
    %133 = sbr.rel (0) target = $region13
  $region12: #{forward.1} parent=0 // pred_region
    _
  $region13: #{forward.1} parent=0 // pred_fallthru
    _
  // Predicated region
  $region14: #{forward.1} parent=0 // pred_check
    _
  $region15: #{forward.1} parent=0 // pred_check_branch
    %135 = sbr.rel (0) target = $region17
  $region16: #{forward.1} parent=0 // pred_region
    _
  $region17: #{forward.1} parent=0 // pred_fallthru
    _

</llo_original>
